<compile_context>
chip_gen: v6e
topology: v6e:2x2x1
jax: 0.10.0
libtpu: 0.0.40
codegen_flags: <defaults>
</compile_context>

<pallas_src>
import functools

import jax
import jax.numpy as jnp
from jax import lax
from jax.experimental import pallas as pl
from jax.experimental.pallas import tpu as pltpu


_NUM_CORES = 2   # leading parallel grid axis (v7x megacore); no-op on 1-TC chips
_LANES = 128
_SUBLANES = 8


def _sc_loss_kernel(x_ref, y_ref, num_out_ref, den_out_ref,
                    num_acc, den_acc, *, total_rows):
    """Grid = (core, row_tile); axis 1 is an 'arbitrary' reduction sweep.

    num_acc / den_acc are tile-shaped f32 accumulators persisting across the
    inner sweep; per step only element-wise VPU adds happen, the cross-lane
    reduction runs once in the finalize step.
    """
    c = pl.program_id(0)
    i = pl.program_id(1)
    n_inner = pl.num_programs(1)
    block_rows = x_ref.shape[0]

    @pl.when(i == 0)
    def _init():
        num_acc[...] = jnp.zeros_like(num_acc)
        den_acc[...] = jnp.zeros_like(den_acc)

    # Logical (unclamped) first row of this tile.
    row_start = (c * n_inner + i) * block_rows

    x = x_ref[...].astype(jnp.float32)
    y = y_ref[...].astype(jnp.float32)
    num_term = jnp.abs(y - x)
    den_term = jnp.abs(y)

    is_full = row_start + block_rows <= total_rows

    # Fast path: interior tile, no masking work at all (the common case).
    @pl.when(is_full)
    def _full_tile():
        num_acc[...] += num_term
        den_acc[...] += den_term

    # Slow path: ragged last tile or fully-out-of-range clamped tile; mask
    # rows >= total_rows so they contribute exactly zero.
    @pl.when(jnp.logical_not(is_full))
    def _ragged_tile():
        row_ids = lax.broadcasted_iota(jnp.int32, (block_rows, 1), 0) + row_start
        valid = row_ids < total_rows
        num_acc[...] += jnp.where(valid, num_term, 0.0)
        den_acc[...] += jnp.where(valid, den_term, 0.0)

    @pl.when(i == n_inner - 1)
    def _finalize():
        num_out_ref[...] = jnp.full(num_out_ref.shape, jnp.sum(num_acc[...]),
                                    dtype=num_out_ref.dtype)
        den_out_ref[...] = jnp.full(den_out_ref.shape, jnp.sum(den_acc[...]),
                                    dtype=den_out_ref.dtype)


@functools.partial(jax.jit, static_argnames=("block_rows",))
def spectral_convergence_loss(x_mag, y_mag, *, block_rows=1024):
    """Pallas implementation of SpectralConvergenceLoss.forward.

    Args:
      x_mag: (B, frames, freq_bins) predicted magnitude spectrogram.
      y_mag: (B, frames, freq_bins) ground-truth magnitude spectrogram.
      block_rows: rows per grid step (static, sweepable).
    Returns:
      scalar f32 loss.
    """
    assert x_mag.shape == y_mag.shape, (x_mag.shape, y_mag.shape)
    B, T, Fq = x_mag.shape
    R = B * T

    # Free, contiguous reshapes only -- no pad / cast passes over HBM.
    x2 = x_mag.reshape(R, Fq)
    y2 = y_mag.reshape(R, Fq)

    # ---- tile sizing: biggest row tile within a conservative VMEM budget ----
    lanes = -(-Fq // _LANES) * _LANES                       # lane-padded width
    in_bytes_per_row = lanes * (x2.dtype.itemsize + y2.dtype.itemsize)
    acc_bytes_per_row = 2 * lanes * 4                       # two f32 accumulators
    bytes_per_row = 2 * in_bytes_per_row + acc_bytes_per_row  # inputs double-buffered
    vmem_budget = 24 * 1024 * 1024                          # safe on v5e/v6e/v7x
    max_rows = max(_SUBLANES,
                   (vmem_budget // bytes_per_row) // _SUBLANES * _SUBLANES)

    if R <= min(block_rows, max_rows):
        br = R                                  # single tile: full-dim block is legal
    else:
        br = max(_SUBLANES, (min(block_rows, max_rows) // _SUBLANES) * _SUBLANES)

    n_tiles = (R + br - 1) // br
    steps_per_core = (n_tiles + _NUM_CORES - 1) // _NUM_CORES

    def in_index_map(c, i):
        # Clamp so the DMA window always overlaps the array; the in-kernel row
        # mask zeroes rows that are logically out of range.
        return (jnp.minimum(c * steps_per_core + i, n_tiles - 1), 0)

    out_block = (_SUBLANES, _LANES)
    out_shape = jax.ShapeDtypeStruct((_NUM_CORES * _SUBLANES, _LANES), jnp.float32)

    n_elems = R * Fq
    cost = pl.CostEstimate(
        flops=6 * n_elems,
        transcendentals=0,
        bytes_accessed=n_elems * (x2.dtype.itemsize + y2.dtype.itemsize)
        + 2 * _NUM_CORES * _SUBLANES * _LANES * 4,
    )

    num_out, den_out = pl.pallas_call(
        functools.partial(_sc_loss_kernel, total_rows=R),
        out_shape=(out_shape, out_shape),
        grid_spec=pltpu.PrefetchScalarGridSpec(
            num_scalar_prefetch=0,
            grid=(_NUM_CORES, steps_per_core),
            in_specs=[
                pl.BlockSpec((br, Fq), in_index_map),
                pl.BlockSpec((br, Fq), in_index_map),
            ],
            out_specs=[
                pl.BlockSpec(out_block, lambda c, i: (c, 0)),
                pl.BlockSpec(out_block, lambda c, i: (c, 0)),
            ],
            scratch_shapes=[
                pltpu.VMEM((br, Fq), jnp.float32),
                pltpu.VMEM((br, Fq), jnp.float32),
            ],
        ),
        compiler_params=pltpu.CompilerParams(
            dimension_semantics=("parallel", "arbitrary"),
            vmem_limit_bytes=32 * 1024 * 1024,
        ),
        cost_estimate=cost,
    )(x2, y2)

    # Each core broadcast its scalar partial sum over its (8, 128) output
    # block; take one element per core and combine in the wrapper.
    num = jnp.sum(num_out.reshape(_NUM_CORES, _SUBLANES * _LANES)[:, 0])
    den = jnp.sum(den_out.reshape(_NUM_CORES, _SUBLANES * _LANES)[:, 0])
    return num / den


if __name__ == "__main__":
    key = jax.random.PRNGKey(0)
    k1, k2, k3, k4, k5, k6 = jax.random.split(key, 6)

    def ref_loss(x, y):
        xf = x.astype(jnp.float32)
        yf = y.astype(jnp.float32)
        return jnp.sum(jnp.abs(yf - xf)) / jnp.sum(jnp.abs(yf))

    # Case 1: small spectrogram, single-tile path.
    B, frames, freq_bins = 2, 16, 32
    x1 = jnp.abs(jax.random.normal(k1, (B, frames, freq_bins), dtype=jnp.float32))
    y1 = jnp.abs(jax.random.normal(k2, (B, frames, freq_bins), dtype=jnp.float32))
    out1 = jax.block_until_ready(spectral_convergence_loss(x1, y1))
    assert jnp.allclose(out1, ref_loss(x1, y1), rtol=1e-5, atol=1e-6), \
        (out1, ref_loss(x1, y1))

    # Case 2: multi-tile sweep with ragged last tile, non-128 freq bins, and a
    # fully-masked tile on the second (parallel) core.
    B, frames, freq_bins = 3, 50, 65
    x2 = jnp.abs(jax.random.normal(k3, (B, frames, freq_bins), dtype=jnp.float32))
    y2 = jnp.abs(jax.random.normal(k4, (B, frames, freq_bins), dtype=jnp.float32))
    out2 = jax.block_until_ready(spectral_convergence_loss(x2, y2, block_rows=64))
    assert jnp.allclose(out2, ref_loss(x2, y2), rtol=1e-5, atol=1e-6), \
        (out2, ref_loss(x2, y2))

    # Case 3: evenly-divided multi-tile sweep (fast unmasked path on every tile).
    B, frames, freq_bins = 2, 64, 128
    x3 = jnp.abs(jax.random.normal(k5, (B, frames, freq_bins), dtype=jnp.float32))
    y3 = jnp.abs(jax.random.normal(k6, (B, frames, freq_bins), dtype=jnp.float32))
    out3 = jax.block_until_ready(spectral_convergence_loss(x3, y3, block_rows=32))
    assert jnp.allclose(out3, ref_loss(x3, y3), rtol=1e-5, atol=1e-6), \
        (out3, ref_loss(x3, y3))

    print("KERNEL_OK")
</pallas_src>

<mosaic_0001>
module attributes {stable_mosaic.version = 11 : i64} {
  func.func @_sc_loss_kernel(%arg0: i32, %arg1: i32, %arg2: memref<32x32xf32, #tpu.memory_space<vmem>>, %arg3: memref<32x32xf32, #tpu.memory_space<vmem>>, %arg4: memref<8x128xf32, #tpu.memory_space<vmem>>, %arg5: memref<8x128xf32, #tpu.memory_space<vmem>>, %arg6: memref<32x32xf32, #tpu.memory_space<vmem>>, %arg7: memref<32x32xf32, #tpu.memory_space<vmem>>) attributes {dimension_semantics = [#tpu.dimension_semantics<parallel>, #tpu.dimension_semantics<arbitrary>], iteration_bounds = array<i64: 2, 1>, scalar_prefetch = 0 : i64, scratch_operands = 2 : i64, tpu.core_type = #tpu.core_type<tc>, window_params = [{transform_indices = @transform_0, window_bounds = array<i64: 32, 32>}, {transform_indices = @transform_1, window_bounds = array<i64: 32, 32>}, {transform_indices = @transform_2, window_bounds = array<i64: 8, 128>}, {transform_indices = @transform_3, window_bounds = array<i64: 8, 128>}]} {
    %c0_i32 = arith.constant 0 : i32
    %0 = arith.cmpi eq, %arg1, %c0_i32 : i32
    %1 = arith.extui %0 : i1 to i32
    %c0_i32_0 = arith.constant 0 : i32
    %2 = arith.cmpi ne, %1, %c0_i32_0 : i32
    scf.if %2 {
      %cst = arith.constant 0.000000e+00 : f32
      %21 = vector.broadcast %cst : f32 to vector<32x32xf32>
      %c0_10 = arith.constant 0 : index
      %c0_11 = arith.constant 0 : index
      %22 = vector.load %arg6[%c0_10, %c0_11] : memref<32x32xf32, #tpu.memory_space<vmem>>, vector<32x32xf32>
      tpu.vector_store %arg6[%c0_10, %c0_11], %21 {strides = array<i32>} : memref<32x32xf32, #tpu.memory_space<vmem>>, vector<32x32xf32>,
      %cst_12 = arith.constant 0.000000e+00 : f32
      %23 = vector.broadcast %cst_12 : f32 to vector<32x32xf32>
      %c0_13 = arith.constant 0 : index
      %c0_14 = arith.constant 0 : index
      %24 = vector.load %arg7[%c0_13, %c0_14] : memref<32x32xf32, #tpu.memory_space<vmem>>, vector<32x32xf32>
      tpu.vector_store %arg7[%c0_13, %c0_14], %23 {strides = array<i32>} : memref<32x32xf32, #tpu.memory_space<vmem>>, vector<32x32xf32>,
    } else {
    }
    %c1_i32 = arith.constant 1 : i32
    %3 = arith.muli %arg0, %c1_i32 : i32
    %4 = arith.addi %3, %arg1 : i32
    %c32_i32 = arith.constant 32 : i32
    %5 = arith.muli %4, %c32_i32 : i32
    %c0 = arith.constant 0 : index
    %c0_1 = arith.constant 0 : index
    %6 = vector.load %arg2[%c0, %c0_1] : memref<32x32xf32, #tpu.memory_space<vmem>>, vector<32x32xf32>
    %c0_2 = arith.constant 0 : index
    %c0_3 = arith.constant 0 : index
    %7 = vector.load %arg3[%c0_2, %c0_3] : memref<32x32xf32, #tpu.memory_space<vmem>>, vector<32x32xf32>
    %8 = arith.subf %7, %6 : vector<32x32xf32>
    %9 = math.absf %8 : vector<32x32xf32>
    %10 = math.absf %7 : vector<32x32xf32>
    %c32_i32_4 = arith.constant 32 : i32
    %11 = arith.addi %5, %c32_i32_4 : i32
    %c32_i32_5 = arith.constant 32 : i32
    %12 = arith.cmpi sle, %11, %c32_i32_5 : i32
    %13 = arith.extui %12 : i1 to i32
    %c0_i32_6 = arith.constant 0 : i32
    %14 = arith.cmpi ne, %13, %c0_i32_6 : i32
    scf.if %14 {
      %c0_10 = arith.constant 0 : index
      %c0_11 = arith.constant 0 : index
      %21 = vector.load %arg6[%c0_10, %c0_11] : memref<32x32xf32, #tpu.memory_space<vmem>>, vector<32x32xf32>
      %22 = arith.addf %21, %9 : vector<32x32xf32>
      %c0_12 = arith.constant 0 : index
      %c0_13 = arith.constant 0 : index
      %23 = vector.load %arg6[%c0_12, %c0_13] : memref<32x32xf32, #tpu.memory_space<vmem>>, vector<32x32xf32>
      tpu.vector_store %arg6[%c0_12, %c0_13], %22 {strides = array<i32>} : memref<32x32xf32, #tpu.memory_space<vmem>>, vector<32x32xf32>,
      %c0_14 = arith.constant 0 : index
      %c0_15 = arith.constant 0 : index
      %24 = vector.load %arg7[%c0_14, %c0_15] : memref<32x32xf32, #tpu.memory_space<vmem>>, vector<32x32xf32>
      %25 = arith.addf %24, %10 : vector<32x32xf32>
      %c0_16 = arith.constant 0 : index
      %c0_17 = arith.constant 0 : index
      %26 = vector.load %arg7[%c0_16, %c0_17] : memref<32x32xf32, #tpu.memory_space<vmem>>, vector<32x32xf32>
      tpu.vector_store %arg7[%c0_16, %c0_17], %25 {strides = array<i32>} : memref<32x32xf32, #tpu.memory_space<vmem>>, vector<32x32xf32>,
    } else {
    }
    %true = arith.constant true
    %15 = arith.xori %12, %true : i1
    %16 = arith.extui %15 : i1 to i32
    %c0_i32_7 = arith.constant 0 : i32
    %17 = arith.cmpi ne, %16, %c0_i32_7 : i32
    scf.if %17 {
      %21 = tpu.iota {dimensions = array<i32: 0>} : vector<32x1xi32>
      %22 = vector.broadcast %5 : i32 to vector<32x1xi32>
      %23 = arith.addi %21, %22 : vector<32x1xi32>
      %c32_i32_10 = arith.constant 32 : i32
      %24 = vector.broadcast %c32_i32_10 : i32 to vector<32x1xi32>
      %25 = arith.cmpi slt, %23, %24 : vector<32x1xi32>
      %c0_11 = arith.constant 0 : index
      %c0_12 = arith.constant 0 : index
      %26 = vector.load %arg6[%c0_11, %c0_12] : memref<32x32xf32, #tpu.memory_space<vmem>>, vector<32x32xf32>
      %cst = arith.constant 0.000000e+00 : f32
      %27 = vector.shape_cast %25 : vector<32x1xi1> to vector<32x1xi1>
      %28 = vector.broadcast %27 : vector<32x1xi1> to vector<32x32xi1>
      %29 = vector.broadcast %cst : f32 to vector<32x32xf32>
      %30 = arith.select %28, %9, %29 : vector<32x32xi1>, vector<32x32xf32>
      %31 = arith.addf %26, %30 : vector<32x32xf32>
      %c0_13 = arith.constant 0 : index
      %c0_14 = arith.constant 0 : index
      %32 = vector.load %arg6[%c0_13, %c0_14] : memref<32x32xf32, #tpu.memory_space<vmem>>, vector<32x32xf32>
      tpu.vector_store %arg6[%c0_13, %c0_14], %31 {strides = array<i32>} : memref<32x32xf32, #tpu.memory_space<vmem>>, vector<32x32xf32>,
      %c0_15 = arith.constant 0 : index
      %c0_16 = arith.constant 0 : index
      %33 = vector.load %arg7[%c0_15, %c0_16] : memref<32x32xf32, #tpu.memory_space<vmem>>, vector<32x32xf32>
      %cst_17 = arith.constant 0.000000e+00 : f32
      %34 = vector.shape_cast %25 : vector<32x1xi1> to vector<32x1xi1>
      %35 = vector.broadcast %34 : vector<32x1xi1> to vector<32x32xi1>
      %36 = vector.broadcast %cst_17 : f32 to vector<32x32xf32>
      %37 = arith.select %35, %10, %36 : vector<32x32xi1>, vector<32x32xf32>
      %38 = arith.addf %33, %37 : vector<32x32xf32>
      %c0_18 = arith.constant 0 : index
      %c0_19 = arith.constant 0 : index
      %39 = vector.load %arg7[%c0_18, %c0_19] : memref<32x32xf32, #tpu.memory_space<vmem>>, vector<32x32xf32>
      tpu.vector_store %arg7[%c0_18, %c0_19], %38 {strides = array<i32>} : memref<32x32xf32, #tpu.memory_space<vmem>>, vector<32x32xf32>,
    } else {
    }
    %c0_i32_8 = arith.constant 0 : i32
    %18 = arith.cmpi eq, %arg1, %c0_i32_8 : i32
    %19 = arith.extui %18 : i1 to i32
    %c0_i32_9 = arith.constant 0 : i32
    %20 = arith.cmpi ne, %19, %c0_i32_9 : i32
    scf.if %20 {
      %c0_10 = arith.constant 0 : index
      %c0_11 = arith.constant 0 : index
      %21 = vector.load %arg6[%c0_10, %c0_11] : memref<32x32xf32, #tpu.memory_space<vmem>>, vector<32x32xf32>
      %22 = vector.shape_cast %21 : vector<32x32xf32> to vector<1x32x32xf32>
      %cst = arith.constant dense<0.000000e+00> : vector<1xf32>
      %23 = vector.multi_reduction <add>, %22, %cst [1, 2] : vector<1x32x32xf32> to vector<1xf32>
      %24 = vector.shape_cast %23 : vector<1xf32> to vector<1x1x1xf32>
      %25 = vector.extract %24[0, 0, 0] : f32 from vector<1x1x1xf32>
      %26 = vector.broadcast %25 : f32 to vector<8x128xf32>
      %c0_12 = arith.constant 0 : index
      %c0_13 = arith.constant 0 : index
      %27 = vector.load %arg4[%c0_12, %c0_13] : memref<8x128xf32, #tpu.memory_space<vmem>>, vector<8x128xf32>
      tpu.vector_store %arg4[%c0_12, %c0_13], %26 {strides = array<i32>} : memref<8x128xf32, #tpu.memory_space<vmem>>, vector<8x128xf32>,
      %c0_14 = arith.constant 0 : index
      %c0_15 = arith.constant 0 : index
      %28 = vector.load %arg7[%c0_14, %c0_15] : memref<32x32xf32, #tpu.memory_space<vmem>>, vector<32x32xf32>
      %29 = vector.shape_cast %28 : vector<32x32xf32> to vector<1x32x32xf32>
      %cst_16 = arith.constant dense<0.000000e+00> : vector<1xf32>
      %30 = vector.multi_reduction <add>, %29, %cst_16 [1, 2] : vector<1x32x32xf32> to vector<1xf32>
      %31 = vector.shape_cast %30 : vector<1xf32> to vector<1x1x1xf32>
      %32 = vector.extract %31[0, 0, 0] : f32 from vector<1x1x1xf32>
      %33 = vector.broadcast %32 : f32 to vector<8x128xf32>
      %c0_17 = arith.constant 0 : index
      %c0_18 = arith.constant 0 : index
      %34 = vector.load %arg5[%c0_17, %c0_18] : memref<8x128xf32, #tpu.memory_space<vmem>>, vector<8x128xf32>
      tpu.vector_store %arg5[%c0_17, %c0_18], %33 {strides = array<i32>} : memref<8x128xf32, #tpu.memory_space<vmem>>, vector<8x128xf32>,
    } else {
    }
    return
  }
  func.func @transform_0(%arg0: i32, %arg1: i32) -> (i32, i32) {
    %c1_i32 = arith.constant 1 : i32
    %0 = arith.muli %arg0, %c1_i32 : i32
    %1 = arith.addi %0, %arg1 : i32
    %c0_i32 = arith.constant 0 : i32
    %2 = arith.minsi %1, %c0_i32 : i32
    %c0_i32_0 = arith.constant 0 : i32
    %c0_i32_1 = arith.constant 0 : i32
    return %2, %c0_i32_0 : i32, i32
  }
  func.func @transform_1(%arg0: i32, %arg1: i32) -> (i32, i32) {
    %c1_i32 = arith.constant 1 : i32
    %0 = arith.muli %arg0, %c1_i32 : i32
    %1 = arith.addi %0, %arg1 : i32
    %c0_i32 = arith.constant 0 : i32
    %2 = arith.minsi %1, %c0_i32 : i32
    %c0_i32_0 = arith.constant 0 : i32
    %c0_i32_1 = arith.constant 0 : i32
    return %2, %c0_i32_0 : i32, i32
  }
  func.func @transform_2(%arg0: i32, %arg1: i32) -> (i32, i32) {
    %c0_i32 = arith.constant 0 : i32
    %c0_i32_0 = arith.constant 0 : i32
    return %arg0, %c0_i32 : i32, i32
  }
  func.func @transform_3(%arg0: i32, %arg1: i32) -> (i32, i32) {
    %c0_i32 = arith.constant 0 : i32
    %c0_i32_0 = arith.constant 0 : i32
    return %arg0, %c0_i32 : i32, i32
  }
}

</mosaic_0001>

<llo_original>
// kernel: spectral_convergence_loss.1
$region0: #{spectral_convergence_loss.1}
  #allocation0 [shape = 'u32[]', space=smem, size = 0x4, offset = 0x4, fixed_abs, tag = 'smem constant byte address 0x4 - core index']
  #allocation1 [shape = 'u32[144,128]{1,0:T(1,128)}', space=vmem, size = 0x12000, scoped, tag = 'internal scratch']
  #allocation2 [shape = 'f32[32,32]{1,0:T(8,128)}', space=vmem, size = 0x4000, scoped, tag = 'scratch operand']
  #allocation3 [shape = 'f32[32,32]{1,0:T(8,128)}', space=vmem, size = 0x4000, scoped, tag = 'scratch operand']
  %s0 = inlined_call_operand.hbm [shape: f32[32,32], index: 0, kind: input, shape index: {}]
  %s1 = inlined_call_operand.hbm [shape: f32[32,32], index: 1, kind: input, shape index: {}]
  %s2 = inlined_call_operand.vmem [shape: f32[16,128], index: 2, kind: output, shape index: {0}]
  %s3 = inlined_call_operand.vmem [shape: f32[16,128], index: 3, kind: output, shape index: {1}]
  %4 = xla_tuple %s2, %s3
  %s5 = sld [smem:[#allocation0]]
  $region73: #{spectral_convergence_loss.1} parent=0
    _
  %s7 = ssub.s32 1, %s5
  %s8 = scalar_select 0, %s7, %s5
  $region1: #{spectral_convergence_loss.1} parent=0
    #allocation4 [shape = 'u8[32768]{0}', space=vmem, size = 0x8000, scoped, tag = 'input window, operand 0']
    #allocation5 [shape = 's32[2]{0}', space=sflag, size = 0x8, scoped, tag = 'scoped memory for spectral_convergence_loss.1']
    #allocation6 [shape = 'u8[32768]{0}', space=vmem, size = 0x8000, scoped, tag = 'input window, operand 1']
    #allocation7 [shape = 's32[2]{0}', space=sflag, size = 0x8, scoped, tag = 'scoped memory for spectral_convergence_loss.1']
    %9 = vsyncpa [#allocation5], 0
    %s10 = scalar_lea.sflag [#allocation5], 1
    %11 = vsyncpa %s10, 0
    %12 = vsyncpa [#allocation7], 0
    %s13 = scalar_lea.sflag [#allocation7], 1
    %14 = vsyncpa %s13, 0
    loop: start=0, step=1, limit=4
    $region2: #{spectral_convergence_loss.1} parent=1 // loop_pre_header
      _
    $region3: #{spectral_convergence_loss.1} parent=1 // loop_header
      %s16 = sphi 0, %s20
      %p17 = scmp.ge.s32.totalorder %s16, 4
      %s23 = sphi 0, %s35
      %s24 = sphi 0, %s31
      %s25 = sphi 0, %s23
      %s26 = sphi 0, %s24
      %s27 = sphi 0, %s25
      %s28 = sphi 0, %s26
      %s44 = sphi 0, %s46
      %s47 = sphi 0, %s44
      %s48 = sphi 0, %s47
      %s64 = sphi 0, %s48
      %s76 = sphi 0, %s78
      %s79 = sphi 0, %s76
      %s80 = sphi 0, %s79
      %s96 = sphi 0, %s80
      %s102 = sphi 0, %s104
      %s105 = sphi 0, %s102
      %s106 = sphi 0, %s105
      %s122 = sphi 0, %s106
      %s128 = sphi 0, %s130
      %s131 = sphi 0, %s128
      %s132 = sphi 0, %s131
      %s148 = sphi 0, %s132
    $region4: #{spectral_convergence_loss.1} parent=1 // loop_header_branch
      %19 = sbr.rel (%p17) target = $region8
    $region5: #{spectral_convergence_loss.1} parent=1 // loop_body
      %s21 = ssub.s32 %s16, 1
      %s22 = ssub.s32 %s16, 2
      %s29 = sadd.s32 1, %s24
      %p30 = scmp.ge.s32.totalorder %s29, 1
      %s31 = scalar_select %p30, 0, %s29
      %s32 = sadd.s32 1, %s23
      %s33 = scalar_select %p30, %s32, %s23
      %p34 = scmp.ge.s32.totalorder %s33, 2
      %s35 = scalar_select %p34, 0, %s33
      %s36 = sadd.s32 %s23, %s24
      %p37 = scmp.lt.s32.totalorder %s36, 0
      %s38 = scalar_select %p37, %s36, 0
      %s39 = sadd.s32 %s35, %s31
      %p40 = scmp.lt.s32.totalorder %s39, 0
      %s41 = scalar_select %p40, %s39, 0
      %s42 = ssub.s32 %s38, %s41
      %p43 = scmp.eq.s32.totalorder %s42, 0
      %s45 = sadd.s32 %s44, 1
      %s46 = scalar_select %p43, %s44, %s45
      %p49 = pneg %p43
      %p50 = scmp.eq.s32.totalorder %s16, 1
      %p51 = por %p49, %p50
      %p52 = scmp.ne.s32.totalorder %s44, %s47
      %p53 = scmp.eq.s32.totalorder %s16, 0
      %p54 = por %p52, %p53
      %p55 = scmp.ne.s32.totalorder %s44, %s47
      %p56 = scmp.eq.s32.totalorder %s21, 1
      %p57 = por %p55, %p56
      %p58 = scmp.ne.s32.totalorder %s47, %s48
      %p59 = scmp.eq.s32.totalorder %s21, 0
      %p60 = por %p58, %p59
      %p61 = scmp.ne.s32.totalorder %s47, %s48
      %p62 = scmp.eq.s32.totalorder %s22, 1
      %p63 = por %p61, %p62
      %p65 = scmp.ne.s32.totalorder %s48, %s64
      %p66 = scmp.eq.s32.totalorder %s22, 0
      %p67 = por %p65, %p66
      %s68 = sadd.s32 %s23, %s24
      %p69 = scmp.lt.s32.totalorder %s68, 0
      %s70 = scalar_select %p69, %s68, 0
      %s71 = sadd.s32 %s35, %s31
      %p72 = scmp.lt.s32.totalorder %s71, 0
      %s73 = scalar_select %p72, %s71, 0
      %s74 = ssub.s32 %s70, %s73
      %p75 = scmp.eq.s32.totalorder %s74, 0
      %s77 = sadd.s32 %s76, 1
      %s78 = scalar_select %p75, %s76, %s77
      %p81 = pneg %p75
      %p82 = scmp.eq.s32.totalorder %s16, 1
      %p83 = por %p81, %p82
      %p84 = scmp.ne.s32.totalorder %s76, %s79
      %p85 = scmp.eq.s32.totalorder %s16, 0
      %p86 = por %p84, %p85
      %p87 = scmp.ne.s32.totalorder %s76, %s79
      %p88 = scmp.eq.s32.totalorder %s21, 1
      %p89 = por %p87, %p88
      %p90 = scmp.ne.s32.totalorder %s79, %s80
      %p91 = scmp.eq.s32.totalorder %s21, 0
      %p92 = por %p90, %p91
      %p93 = scmp.ne.s32.totalorder %s79, %s80
      %p94 = scmp.eq.s32.totalorder %s22, 1
      %p95 = por %p93, %p94
      %p97 = scmp.ne.s32.totalorder %s80, %s96
      %p98 = scmp.eq.s32.totalorder %s22, 0
      %p99 = por %p97, %p98
      %s100 = ssub.s32 %s23, %s35
      %p101 = scmp.eq.s32.totalorder %s100, 0
      %s103 = sadd.s32 %s102, 1
      %s104 = scalar_select %p101, %s102, %s103
      %p107 = pneg %p101
      %p108 = scmp.eq.s32.totalorder %s16, 1
      %p109 = por %p107, %p108
      %p110 = scmp.ne.s32.totalorder %s102, %s105
      %p111 = scmp.eq.s32.totalorder %s16, 0
      %p112 = por %p110, %p111
      %p113 = scmp.ne.s32.totalorder %s102, %s105
      %p114 = scmp.eq.s32.totalorder %s21, 1
      %p115 = por %p113, %p114
      %p116 = scmp.ne.s32.totalorder %s105, %s106
      %p117 = scmp.eq.s32.totalorder %s21, 0
      %p118 = por %p116, %p117
      %p119 = scmp.ne.s32.totalorder %s105, %s106
      %p120 = scmp.eq.s32.totalorder %s22, 1
      %p121 = por %p119, %p120
      %p123 = scmp.ne.s32.totalorder %s106, %s122
      %p124 = scmp.eq.s32.totalorder %s22, 0
      %p125 = por %p123, %p124
      %s126 = ssub.s32 %s23, %s35
      %p127 = scmp.eq.s32.totalorder %s126, 0
      %s129 = sadd.s32 %s128, 1
      %s130 = scalar_select %p127, %s128, %s129
      %p133 = pneg %p127
      %p134 = scmp.eq.s32.totalorder %s16, 1
      %p135 = por %p133, %p134
      %p136 = scmp.ne.s32.totalorder %s128, %s131
      %p137 = scmp.eq.s32.totalorder %s16, 0
      %p138 = por %p136, %p137
      %p139 = scmp.ne.s32.totalorder %s128, %s131
      %p140 = scmp.eq.s32.totalorder %s21, 1
      %p141 = por %p139, %p140
      %p142 = scmp.ne.s32.totalorder %s131, %s132
      %p143 = scmp.eq.s32.totalorder %s21, 0
      %p144 = por %p142, %p143
      %p145 = scmp.ne.s32.totalorder %s131, %s132
      %p146 = scmp.eq.s32.totalorder %s22, 1
      %p147 = por %p145, %p146
      %p149 = scmp.ne.s32.totalorder %s132, %s148
      %p150 = scmp.eq.s32.totalorder %s22, 0
      %p151 = por %p149, %p150
      %p152 = scmp.le.s32.totalorder 1, %s16
      %p153 = scmp.lt.s32.totalorder %s16, 3
      %p154 = pnand %p152, %p153
      %p155 = pneg %p154
      // Predicated region
      $region9: #{spectral_convergence_loss.1} parent=5 // pred_check
        _
      $region10: #{spectral_convergence_loss.1} parent=5 // pred_check_branch
        %157 = sbr.rel (%p154) target = $region12
      $region11: #{spectral_convergence_loss.1} parent=5 // pred_region
        %s158 = ssub.s32 %s16, 1
      $region12: #{spectral_convergence_loss.1} parent=5 // pred_fallthru
        _
      %p159 = scmp.lt.s32.totalorder %s16, 2
      // Predicated region
      $region13: #{spectral_convergence_loss.1} parent=5 // pred_check
        %p160 = pneg %p159
      $region14: #{spectral_convergence_loss.1} parent=5 // pred_check_branch
        %162 = sbr.rel (%p160) target = $region16
      $region15: #{spectral_convergence_loss.1} parent=5 // pred_region
        // Predicated region
        $region17: #{spectral_convergence_loss.1} parent=15 // pred_check
          %p163 = pneg %p54
        $region18: #{spectral_convergence_loss.1} parent=15 // pred_check_branch
          %165 = sbr.rel (%p163) target = $region20
        $region19: #{spectral_convergence_loss.1} parent=15 // pred_region
          %s166 = sand.u32 %s44, 1
          %s167 = scalar_lea.sflag [#allocation5], %s166
          %s168 = sand.u32 %s44, 1
          %s169 = smul.addr %s168, 32
          %s170 = scalar_lea.vmem [#allocation4], %s169
          %s171 = sadd.s32 %s23, %s24
          %p172 = scmp.lt.s32.totalorder %s171, 0
          %s173 = scalar_select %p172, %s171, 0
          %s174 = smul.u32 4, %s173
          %s176 = ssub.s32 512, 512
          %177 = vsyncadd %s167, %s176
          %s178 = smul.addr %s174, 128
          %s179 = scalar_lea.hbm %s0, %s178
          %s180 = sshll.u32 %s170, 4
          %s181 = int_to_ptr.vmem [resolvable:$true] %s180
          %186 = dma.hbm_to_vmem [thread:$0]  %s179, 512, %s181, %s167, 128, 128, 8
        $region20: #{spectral_convergence_loss.1} parent=15 // pred_fallthru
          _
        // Predicated region
        $region21: #{spectral_convergence_loss.1} parent=15 // pred_check
          %p187 = pneg %p86
        $region22: #{spectral_convergence_loss.1} parent=15 // pred_check_branch
          %189 = sbr.rel (%p187) target = $region24
        $region23: #{spectral_convergence_loss.1} parent=15 // pred_region
          %s190 = sand.u32 %s76, 1
          %s191 = scalar_lea.sflag [#allocation7], %s190
          %s192 = sand.u32 %s76, 1
          %s193 = smul.addr %s192, 32
          %s194 = scalar_lea.vmem [#allocation6], %s193
          %s195 = sadd.s32 %s23, %s24
          %p196 = scmp.lt.s32.totalorder %s195, 0
          %s197 = scalar_select %p196, %s195, 0
          %s198 = smul.u32 4, %s197
          %s200 = ssub.s32 512, 512
          %201 = vsyncadd %s191, %s200
          %s202 = smul.addr %s198, 128
          %s203 = scalar_lea.hbm %s1, %s202
          %s204 = sshll.u32 %s194, 4
          %s205 = int_to_ptr.vmem [resolvable:$true] %s204
          %210 = dma.hbm_to_vmem [thread:$0]  %s203, 512, %s205, %s191, 128, 128, 8
        $region24: #{spectral_convergence_loss.1} parent=15 // pred_fallthru
          _
      $region16: #{spectral_convergence_loss.1} parent=5 // pred_fallthru
        _
      %p211 = scmp.le.s32.totalorder 1, %s16
      %p212 = scmp.lt.s32.totalorder %s16, 3
      %p213 = pnand %p211, %p212
      %p214 = pneg %p213
      // Predicated region
      $region25: #{spectral_convergence_loss.1} parent=5 // pred_check
        _
      $region26: #{spectral_convergence_loss.1} parent=5 // pred_check_branch
        %216 = sbr.rel (%p213) target = $region28
      $region27: #{spectral_convergence_loss.1} parent=5 // pred_region
        %s217 = ssub.s32 %s16, 1
        %s218 = sand.u32 %s47, 1
        %s219 = scalar_lea.sflag [#allocation5], %s218
        %s220 = sand.u32 %s47, 1
        %s221 = smul.addr %s220, 32
        %s222 = scalar_lea.vmem [#allocation4], %s221
        // Predicated region
        $region29: #{spectral_convergence_loss.1} parent=27 // pred_check
          %p223 = pneg %p60
        $region30: #{spectral_convergence_loss.1} parent=27 // pred_check_branch
          %225 = sbr.rel (%p223) target = $region32
        $region31: #{spectral_convergence_loss.1} parent=27 // pred_region
          %226 = dma.done %s219, 512
        $region32: #{spectral_convergence_loss.1} parent=27 // pred_fallthru
          _
        %s227 = sand.u32 %s79, 1
        %s228 = scalar_lea.sflag [#allocation7], %s227
        %s229 = sand.u32 %s79, 1
        %s230 = smul.addr %s229, 32
        %s231 = scalar_lea.vmem [#allocation6], %s230
        // Predicated region
        $region33: #{spectral_convergence_loss.1} parent=27 // pred_check
          %p232 = pneg %p92
        $region34: #{spectral_convergence_loss.1} parent=27 // pred_check_branch
          %234 = sbr.rel (%p232) target = $region36
        $region35: #{spectral_convergence_loss.1} parent=27 // pred_region
          %235 = dma.done %s228, 512
        $region36: #{spectral_convergence_loss.1} parent=27 // pred_fallthru
          _
        %s236 = sand.u32 %s47, 1
        %s237 = scalar_lea.sflag [#allocation5], %s236
        %s238 = sand.u32 %s47, 1
        %s239 = smul.addr %s238, 32
        %s240 = scalar_lea.vmem [#allocation4], %s239
        %p241 = pneg %p60
        %p242 = pneg %p57
        %s243 = sand.u32 %s79, 1
        %s244 = scalar_lea.sflag [#allocation7], %s243
        %s245 = sand.u32 %s79, 1
        %s246 = smul.addr %s245, 32
        %s247 = scalar_lea.vmem [#allocation6], %s246
        %p248 = pneg %p92
        %p249 = pneg %p89
        %p250 = pneg %p118
        %p251 = pneg %p115
        %p252 = scmp.lt.s32.totalorder %s25, 1
        %s253 = scalar_select %p252, %s25, 1
        %s254 = smul.addr %s253, 8
        %s255 = scalar_lea.vmem %s2, %s254
        %p256 = pneg %p144
        %p257 = pneg %p141
        %p258 = scmp.lt.s32.totalorder %s25, 1
        %s259 = scalar_select %p258, %s25, 1
        %s260 = smul.addr %s259, 8
        %s261 = scalar_lea.vmem %s3, %s260
        %s262 = sadd.s32 %s25, %s26
        %p263 = scmp.lt.s32.totalorder %s262, 0
        %s264 = scalar_select %p263, %s262, 0
        %s265 = smul.u32 4, %s264
        %s266 = sadd.s32 %s25, %s26
        %p267 = scmp.lt.s32.totalorder %s266, 0
        %s268 = scalar_select %p267, %s266, 0
        %s269 = smul.u32 4, %s268
        %p270 = scmp.lt.s32.totalorder %s25, 1
        %s271 = scalar_select %p270, %s25, 1
        %s272 = smul.addr %s271, 8
        %s273 = scalar_lea.vmem %s2, %s272
        %p274 = scmp.lt.s32.totalorder %s25, 1
        %s275 = scalar_select %p274, %s25, 1
        %s276 = smul.addr %s275, 8
        %s277 = scalar_lea.vmem %s3, %s276
        %p278 = scmp.eq.s32.totalorder %s26, 0
        // Predicated region
        $region37: #{spectral_convergence_loss.1} parent=27 // pred_check
          %p279 = pneg %p278
        $region38: #{spectral_convergence_loss.1} parent=27 // pred_check_branch
          %281 = sbr.rel (%p279) target = $region40
        $region39: #{spectral_convergence_loss.1} parent=27 // pred_region
          %vm282 = vcmask 261120
          %283 = vst.msk [vmem:[#allocation2] sm:$0xff] %vm282, 0.0
          %284 = vst.msk [vmem:[#allocation2 + $0x8] sm:$0xff] %vm282, 0.0
          %285 = vst.msk [vmem:[#allocation2 + $0x10] sm:$0xff] %vm282, 0.0
          %286 = vst.msk [vmem:[#allocation2 + $0x18] sm:$0xff] %vm282, 0.0
          %287 = vst.msk [vmem:[#allocation3] sm:$0xff] %vm282, 0.0
          %288 = vst.msk [vmem:[#allocation3 + $0x8] sm:$0xff] %vm282, 0.0
          %289 = vst.msk [vmem:[#allocation3 + $0x10] sm:$0xff] %vm282, 0.0
          %290 = vst.msk [vmem:[#allocation3 + $0x18] sm:$0xff] %vm282, 0.0
        $region40: #{spectral_convergence_loss.1} parent=27 // pred_fallthru
          _
        %s291 = sadd.s32 %s25, %s26
        %s292 = smul.u32 %s291, 32
        %v293 = vld [vmem:[%s222] sm:$0xff]
        %v294 = vld [vmem:[%s222 + $0x8] sm:$0xff]
        %v295 = vld [vmem:[%s222 + $0x10] sm:$0xff]
        %v296 = vld [vmem:[%s222 + $0x18] sm:$0xff]
        %v297 = vld [vmem:[%s231] sm:$0xff]
        %v298 = vld [vmem:[%s231 + $0x8] sm:$0xff]
        %v299 = vld [vmem:[%s231 + $0x10] sm:$0xff]
        %v300 = vld [vmem:[%s231 + $0x18] sm:$0xff]
        %v301 = vsub.f32 %v297, %v293
        %v302 = vsub.f32 %v298, %v294
        %v303 = vsub.f32 %v299, %v295
        %v304 = vsub.f32 %v300, %v296
        %v305 = vand.u32 2147483647, %v301
        %v306 = vand.u32 2147483647, %v302
        %v307 = vand.u32 2147483647, %v303
        %v308 = vand.u32 2147483647, %v304
        %v309 = vand.u32 2147483647, %v297
        %v310 = vand.u32 2147483647, %v298
        %v311 = vand.u32 2147483647, %v299
        %v312 = vand.u32 2147483647, %v300
        %s313 = sadd.s32 %s292, 32
        %p314 = scmp.le.s32.totalorder %s313, 32
        // Predicated region
        $region41: #{spectral_convergence_loss.1} parent=27 // pred_check
          %p315 = pneg %p314
        $region42: #{spectral_convergence_loss.1} parent=27 // pred_check_branch
          %317 = sbr.rel (%p315) target = $region44
        $region43: #{spectral_convergence_loss.1} parent=27 // pred_region
          %v318 = vld [vmem:[#allocation2] sm:$0xff]
          %v319 = vld [vmem:[#allocation2 + $0x8] sm:$0xff]
          %v320 = vld [vmem:[#allocation2 + $0x10] sm:$0xff]
          %v321 = vld [vmem:[#allocation2 + $0x18] sm:$0xff]
          %v322 = vadd.f32 %v318, %v305
          %v323 = vadd.f32 %v319, %v306
          %v324 = vadd.f32 %v320, %v307
          %v325 = vadd.f32 %v321, %v308
          %vm326 = vcmask 261120
          %327 = vst.msk [vmem:[#allocation2] sm:$0xff] %vm326, %v322
          %328 = vst.msk [vmem:[#allocation2 + $0x8] sm:$0xff] %vm326, %v323
          %329 = vst.msk [vmem:[#allocation2 + $0x10] sm:$0xff] %vm326, %v324
          %330 = vst.msk [vmem:[#allocation2 + $0x18] sm:$0xff] %vm326, %v325
          %v331 = vld [vmem:[#allocation3] sm:$0xff]
          %v332 = vld [vmem:[#allocation3 + $0x8] sm:$0xff]
          %v333 = vld [vmem:[#allocation3 + $0x10] sm:$0xff]
          %v334 = vld [vmem:[#allocation3 + $0x18] sm:$0xff]
          %v335 = vadd.f32 %v331, %v309
          %v336 = vadd.f32 %v332, %v310
          %v337 = vadd.f32 %v333, %v311
          %v338 = vadd.f32 %v334, %v312
          %339 = vst.msk [vmem:[#allocation3] sm:$0xff] %vm326, %v335
          %340 = vst.msk [vmem:[#allocation3 + $0x8] sm:$0xff] %vm326, %v336
          %341 = vst.msk [vmem:[#allocation3 + $0x10] sm:$0xff] %vm326, %v337
          %342 = vst.msk [vmem:[#allocation3 + $0x18] sm:$0xff] %vm326, %v338
        $region44: #{spectral_convergence_loss.1} parent=27 // pred_fallthru
          _
        %p343 = scmp.gt.s32.totalorder %s313, 32
        // Predicated region
        $region45: #{spectral_convergence_loss.1} parent=27 // pred_check
          %p344 = pneg %p343
        $region46: #{spectral_convergence_loss.1} parent=27 // pred_check_branch
          %346 = sbr.rel (%p344) target = $region48
        $region47: #{spectral_convergence_loss.1} parent=27 // pred_region
          %v347 = vlaneseq
          %v348 = vshrl.u32 %v347, 7
          %v349 = vadd.s32 %v348, 8
          %v350 = vadd.s32 %v348, 16
          %v351 = vadd.s32 %v348, 24
          %v352 = vstv %s292
          %v353 = vadd.s32 %v348, %v352
          %v354 = vadd.s32 %v349, %v352
          %v355 = vadd.s32 %v350, %v352
          %v356 = vadd.s32 %v351, %v352
          %vm357 = vcmp.lt.s32.totalorder %v353, 32
          %vm358 = vcmp.lt.s32.totalorder %v354, 32
          %vm359 = vcmp.lt.s32.totalorder %v355, 32
          %vm360 = vcmp.lt.s32.totalorder %v356, 32
          %v361 = vld [vmem:[#allocation2] sm:$0xff]
          %v362 = vld [vmem:[#allocation2 + $0x8] sm:$0xff]
          %v363 = vld [vmem:[#allocation2 + $0x10] sm:$0xff]
          %v364 = vld [vmem:[#allocation2 + $0x18] sm:$0xff]
          %v365 = vsel %vm357, 1, 0
          %v366 = vsel %vm358, 1, 0
          %v367 = vsel %vm359, 1, 0
          %v368 = vsel %vm360, 1, 0
          %vm369 = vcmp.eq.s32.totalorder %v365, 1
          %vm370 = vcmp.eq.s32.totalorder %v366, 1
          %vm371 = vcmp.eq.s32.totalorder %v367, 1
          %vm372 = vcmp.eq.s32.totalorder %v368, 1
          %v373 = vsel %vm369, %v305, 0.0
          %v374 = vsel %vm370, %v306, 0.0
          %v375 = vsel %vm371, %v307, 0.0
          %v376 = vsel %vm372, %v308, 0.0
          %v377 = vadd.f32 %v361, %v373
          %v378 = vadd.f32 %v362, %v374
          %v379 = vadd.f32 %v363, %v375
          %v380 = vadd.f32 %v364, %v376
          %vm381 = vcmask 261120
          %382 = vst.msk [vmem:[#allocation2] sm:$0xff] %vm381, %v377
          %383 = vst.msk [vmem:[#allocation2 + $0x8] sm:$0xff] %vm381, %v378
          %384 = vst.msk [vmem:[#allocation2 + $0x10] sm:$0xff] %vm381, %v379
          %385 = vst.msk [vmem:[#allocation2 + $0x18] sm:$0xff] %vm381, %v380
          %v386 = vld [vmem:[#allocation3] sm:$0xff]
          %v387 = vld [vmem:[#allocation3 + $0x8] sm:$0xff]
          %v388 = vld [vmem:[#allocation3 + $0x10] sm:$0xff]
          %v389 = vld [vmem:[#allocation3 + $0x18] sm:$0xff]
          %v390 = vsel %vm369, %v309, 0.0
          %v391 = vsel %vm370, %v310, 0.0
          %v392 = vsel %vm371, %v311, 0.0
          %v393 = vsel %vm372, %v312, 0.0
          %v394 = vadd.f32 %v386, %v390
          %v395 = vadd.f32 %v387, %v391
          %v396 = vadd.f32 %v388, %v392
          %v397 = vadd.f32 %v389, %v393
          %398 = vst.msk [vmem:[#allocation3] sm:$0xff] %vm381, %v394
          %399 = vst.msk [vmem:[#allocation3 + $0x8] sm:$0xff] %vm381, %v395
          %400 = vst.msk [vmem:[#allocation3 + $0x10] sm:$0xff] %vm381, %v396
          %401 = vst.msk [vmem:[#allocation3 + $0x18] sm:$0xff] %vm381, %v397
        $region48: #{spectral_convergence_loss.1} parent=27 // pred_fallthru
          _
        // Predicated region
        $region49: #{spectral_convergence_loss.1} parent=27 // pred_check
          %p402 = pneg %p278
        $region50: #{spectral_convergence_loss.1} parent=27 // pred_check_branch
          %404 = sbr.rel (%p402) target = $region52
        $region51: #{spectral_convergence_loss.1} parent=27 // pred_region
          %v405 = vld [vmem:[#allocation2] sm:$0xff]
          %v406 = vld [vmem:[#allocation2 + $0x8] sm:$0xff]
          %v407 = vld [vmem:[#allocation2 + $0x10] sm:$0xff]
          %v408 = vld [vmem:[#allocation2 + $0x18] sm:$0xff]
          %vm409 = vcmask 261120
          %v410 = vsel %vm409, %v405, 0.0
          %v411 = vsel %vm409, %v406, 0.0
          %v412 = vadd.f32 %v410, %v411
          %v413 = vsel %vm409, %v407, 0.0
          %v414 = vadd.f32 %v412, %v413
          %v415 = vsel %vm409, %v408, 0.0
          %v416 = vadd.f32 %v414, %v415
          %417 = vadd.xlane.f32.xlu0 %v416
          %v418 = vpop.xlane.xlu0 %417
          %v419 = vrot.slane %v418, 4
          %v420 = vadd.f32 %v418, %v419
          %v421 = vrot.slane %v420, 2
          %v422 = vadd.f32 %v420, %v421
          %v423 = vrot.slane %v422, 1
          %v424 = vadd.f32 %v422, %v423
          %s425 = vtos %v424
          %v426 = vstv %s425
          %427 = vst [vmem:[%s273] sm:$0xff] %v426
          %v428 = vld [vmem:[#allocation3] sm:$0xff]
          %v429 = vld [vmem:[#allocation3 + $0x8] sm:$0xff]
          %v430 = vld [vmem:[#allocation3 + $0x10] sm:$0xff]
          %v431 = vld [vmem:[#allocation3 + $0x18] sm:$0xff]
          %v432 = vsel %vm409, %v428, 0.0
          %v433 = vsel %vm409, %v429, 0.0
          %v434 = vadd.f32 %v432, %v433
          %v435 = vsel %vm409, %v430, 0.0
          %v436 = vadd.f32 %v434, %v435
          %v437 = vsel %vm409, %v431, 0.0
          %v438 = vadd.f32 %v436, %v437
          %439 = vadd.xlane.f32.xlu0 %v438
          %v440 = vpop.xlane.xlu0 %439
          %v441 = vrot.slane %v440, 4
          %v442 = vadd.f32 %v440, %v441
          %v443 = vrot.slane %v442, 2
          %v444 = vadd.f32 %v442, %v443
          %v445 = vrot.slane %v444, 1
          %v446 = vadd.f32 %v444, %v445
          %s447 = vtos %v446
          %v448 = vstv %s447
          %449 = vst [vmem:[%s277] sm:$0xff] %v448
        $region52: #{spectral_convergence_loss.1} parent=27 // pred_fallthru
          _
        %p450 = scmp.lt.s32.totalorder %s25, 1
        %s451 = scalar_select %p450, %s25, 1
        %s452 = smul.addr %s451, 8
        %s453 = scalar_lea.vmem %s2, %s452
        %p454 = scmp.lt.s32.totalorder %s25, 1
        %s455 = scalar_select %p454, %s25, 1
        %s456 = smul.addr %s455, 8
        %s457 = scalar_lea.vmem %s3, %s456
        // Predicated region
        $region53: #{spectral_convergence_loss.1} parent=27 // pred_check
          %p458 = pneg %p115
        $region54: #{spectral_convergence_loss.1} parent=27 // pred_check_branch
          %460 = sbr.rel (%p458) target = $region56
        $region55: #{spectral_convergence_loss.1} parent=27 // pred_region
          _
        $region56: #{spectral_convergence_loss.1} parent=27 // pred_fallthru
          _
        // Predicated region
        $region57: #{spectral_convergence_loss.1} parent=27 // pred_check
          %p461 = pneg %p141
        $region58: #{spectral_convergence_loss.1} parent=27 // pred_check_branch
          %463 = sbr.rel (%p461) target = $region60
        $region59: #{spectral_convergence_loss.1} parent=27 // pred_region
          _
        $region60: #{spectral_convergence_loss.1} parent=27 // pred_fallthru
          _
      $region28: #{spectral_convergence_loss.1} parent=5 // pred_fallthru
        _
      %p464 = scmp.le.s32.totalorder 2, %s16
      // Predicated region
      $region61: #{spectral_convergence_loss.1} parent=5 // pred_check
        %p465 = pneg %p464
      $region62: #{spectral_convergence_loss.1} parent=5 // pred_check_branch
        %467 = sbr.rel (%p465) target = $region64
      $region63: #{spectral_convergence_loss.1} parent=5 // pred_region
        %s468 = ssub.s32 %s16, 2
        // Predicated region
        $region65: #{spectral_convergence_loss.1} parent=63 // pred_check
          %p469 = pneg %p121
        $region66: #{spectral_convergence_loss.1} parent=63 // pred_check_branch
          %471 = sbr.rel (%p469) target = $region68
        $region67: #{spectral_convergence_loss.1} parent=63 // pred_region
          %p472 = scmp.lt.s32.totalorder %s27, 1
          %s473 = scalar_select %p472, %s27, 1
          %s474 = smul.addr %s473, 8
          %s475 = scalar_lea.vmem %s2, %s474
        $region68: #{spectral_convergence_loss.1} parent=63 // pred_fallthru
          _
        // Predicated region
        $region69: #{spectral_convergence_loss.1} parent=63 // pred_check
          %p476 = pneg %p147
        $region70: #{spectral_convergence_loss.1} parent=63 // pred_check_branch
          %478 = sbr.rel (%p476) target = $region72
        $region71: #{spectral_convergence_loss.1} parent=63 // pred_region
          %p479 = scmp.lt.s32.totalorder %s27, 1
          %s480 = scalar_select %p479, %s27, 1
          %s481 = smul.addr %s480, 8
          %s482 = scalar_lea.vmem %s3, %s481
        $region72: #{spectral_convergence_loss.1} parent=63 // pred_fallthru
          _
      $region64: #{spectral_convergence_loss.1} parent=5 // pred_fallthru
        _
    $region6: #{spectral_convergence_loss.1} parent=1 // loop_footer
      %s20 = sadd.s32 1, %s16
    $region7: #{spectral_convergence_loss.1} parent=1 // loop_footer_branch
      %15 = sbr.rel target = $region3
    $region8: #{spectral_convergence_loss.1} parent=1 // loop_exit
      _
    %483 = vsyncpa [#allocation5], 1
    %s484 = scalar_lea.sflag [#allocation5], 1
    %485 = vsyncpa %s484, 1
    %486 = vsyncpa [#allocation7], 1
    %s487 = scalar_lea.sflag [#allocation7], 1
    %488 = vsyncpa %s487, 1

</llo_original>
